<compile_context>
chip_gen: v7x
topology: tpu7x:2x2x1
jax: 0.10.0
libtpu: 0.0.40
codegen_flags: <defaults>
</compile_context>

<pallas_src>
import functools

import jax
import jax.numpy as jnp
from jax import lax
from jax.experimental import pallas as pl
from jax.experimental.pallas import tpu as pltpu

EPS = 1e-5                 # matches torch reference (var + 1e-5 before sqrt)
_LANE = 128
_SUBLANE = 8
_MIB = 1024 * 1024


def _query_vmem_bytes():
    """Best-effort VMEM capacity query; 0 if it cannot be determined."""
    try:
        info = pltpu.get_tpu_info()
        for attr in ("vmem_capacity_bytes", "vmem_bytes", "vmem_size_bytes"):
            v = getattr(info, attr, None)
            if v:
                return int(v)
    except Exception:
        pass
    return 0


@functools.lru_cache(maxsize=None)
def _hw_budgets():
    """(tile_bytes, vmem_limit_bytes, want_nc_splits) from the local chip's VMEM size."""
    vmem = _query_vmem_bytes()
    if vmem >= 112 * _MIB:
        # v5e / v6e: 128 MiB physical VMEM, single TensorCore.
        return 12 * _MIB, 96 * _MIB, 1
    # v7x-class (64 MiB per TC) or unknown: conservative budget; 2 TCs -> want >= 4
    # NC tiles so the "parallel" axis feeds both cores.
    return 5 * _MIB, 44 * _MIB, 4


def _choose_tiles(nc, hw, itemsize, tile_bytes, want_nc_splits):
    """Pick (TILE_NC, TILE_HW) honoring (8,128)/packed-sublane rules and a VMEM budget."""
    # Sub-32-bit dtypes pack along sublanes: native tile is (16,128) bf16 / (32,128) i8.
    smult = _SUBLANE * max(1, 4 // itemsize)
    if nc <= smult:
        tile_nc = nc                                     # full extent -> no sublane rule
    else:
        max_rows = max(smult, (tile_bytes // max(1, hw * itemsize)) // smult * smult)
        tile_nc = min(max_rows, nc // smult * smult)
        if want_nc_splits > 1:                           # keep >= N row-tiles (megacore)
            cap = pl.cdiv(pl.cdiv(nc, want_nc_splits), smult) * smult
            tile_nc = max(smult, min(tile_nc, cap))
    if hw <= _LANE or tile_nc * hw * itemsize <= tile_bytes:
        tile_hw = hw                                     # full spatial extent per tile
    else:
        tile_hw = max(_LANE, (tile_bytes // (tile_nc * itemsize)) // _LANE * _LANE)
        tile_hw = min(tile_hw, pl.cdiv(hw, _LANE) * _LANE)
    return tile_nc, tile_hw


def _write_abs_moments(mean, var, mean_ref, std_ref):
    std = jnp.sqrt(jnp.maximum(var, 0.0) + EPS)          # sqrt >= 0, so torch.abs is a no-op
    rows, lanes = mean_ref.shape
    mean_ref[...] = jnp.broadcast_to(jnp.abs(mean), (rows, lanes))
    std_ref[...] = jnp.broadcast_to(std, (rows, lanes))


def _moments_kernel_full_hw(x_ref, mean_ref, std_ref, *, hw):
    """Grid (G_nc,): whole spatial extent resident -> one-pass sum / sum-of-squares."""
    x = x_ref[...].astype(jnp.float32)                   # (TILE_NC, HW), cast in-kernel
    s = jnp.sum(x, axis=1, keepdims=True)
    ssq = jnp.sum(x * x, axis=1, keepdims=True)
    mean = s / hw
    var = (ssq - s * mean) / (hw - 1)                    # unbiased; NaN at hw==1 like torch.var
    _write_abs_moments(mean, var, mean_ref, std_ref)


def _moments_kernel_tiled_hw(x_ref, mean_ref, std_ref, sum_ref, ssq_ref, *,
                             hw, tile_hw, ragged):
    """Grid (G_nc, G_hw): one-pass sum / sum-of-squares accumulation across HW tiles."""
    k = pl.program_id(1)
    last = pl.num_programs(1) - 1

    @pl.when(k == 0)
    def _():
        sum_ref[...] = jnp.zeros_like(sum_ref)
        ssq_ref[...] = jnp.zeros_like(ssq_ref)

    x = x_ref[...].astype(jnp.float32)                   # (TILE_NC, TILE_HW)

    def _acc(xv):
        sum_ref[...] += jnp.sum(xv, axis=1, keepdims=True)
        ssq_ref[...] += jnp.sum(xv * xv, axis=1, keepdims=True)

    if ragged:
        # Compile-time gate: only the LAST HW tile can read past hw, so only it pays
        # the iota/compare/select mask; every other tile stays on the plain VALU path.
        @pl.when(k == last)
        def _():
            col = k * tile_hw + lax.broadcasted_iota(jnp.int32, x.shape, 1)
            _acc(jnp.where(col < hw, x, 0.0))

        @pl.when(k != last)
        def _():
            _acc(x)
    else:
        _acc(x)

    @pl.when(k == last)
    def _():
        s = sum_ref[...]
        mean = s / hw
        var = (ssq_ref[...] - s * mean) / (hw - 1)       # one-pass unbiased variance (f32 acc)
        _write_abs_moments(mean, var, mean_ref, std_ref)


def _row_abs_moments(x2d, *, tile_bytes=None):
    """Per-row |mean| and |std| of a (NC, HW) array, each returned as (NC,) float32."""
    nc, hw = x2d.shape
    auto_tile, vmem_limit, want_splits = _hw_budgets()
    if tile_bytes is None:
        tile_bytes = auto_tile
    tile_nc, tile_hw = _choose_tiles(nc, hw, x2d.dtype.itemsize, tile_bytes, want_splits)
    g_nc, g_hw = pl.cdiv(nc, tile_nc), pl.cdiv(hw, tile_hw)
    nc_pad = g_nc * tile_nc

    out_shape = (jax.ShapeDtypeStruct((nc_pad, _LANE), jnp.float32),
                 jax.ShapeDtypeStruct((nc_pad, _LANE), jnp.float32))

    if g_hw == 1:
        kernel = functools.partial(_moments_kernel_full_hw, hw=hw)
        grid = (g_nc,)
        in_specs = [pl.BlockSpec((tile_nc, hw), lambda i: (i, 0))]
        out_specs = [pl.BlockSpec((tile_nc, _LANE), lambda i: (i, 0)),
                     pl.BlockSpec((tile_nc, _LANE), lambda i: (i, 0))]
        scratch = []
        dims = ("parallel",)
    else:
        kernel = functools.partial(_moments_kernel_tiled_hw, hw=hw, tile_hw=tile_hw,
                                   ragged=(hw % tile_hw != 0))
        grid = (g_nc, g_hw)                              # reduction (HW) axis last
        in_specs = [pl.BlockSpec((tile_nc, tile_hw), lambda i, k: (i, k))]
        out_specs = [pl.BlockSpec((tile_nc, _LANE), lambda i, k: (i, 0)),
                     pl.BlockSpec((tile_nc, _LANE), lambda i, k: (i, 0))]
        scratch = [pltpu.VMEM((tile_nc, 1), jnp.float32),
                   pltpu.VMEM((tile_nc, 1), jnp.float32)]
        dims = ("parallel", "arbitrary")

    mean_lanes, std_lanes = pl.pallas_call(
        kernel,
        out_shape=out_shape,
        grid_spec=pltpu.PrefetchScalarGridSpec(
            num_scalar_prefetch=0,
            grid=grid,
            in_specs=in_specs,
            out_specs=out_specs,
            scratch_shapes=scratch),
        compiler_params=pltpu.CompilerParams(
            dimension_semantics=dims,
            vmem_limit_bytes=vmem_limit),
    )(x2d)
    return mean_lanes[:nc, 0], std_lanes[:nc, 0]


def compute_abs_moments(x, *, tile_bytes=None):
    """abs(moment1), abs(moment2) of an NCHW feature map, each (N, C, 1, 1) float32."""
    n, c, h, w = x.shape
    m, s = _row_abs_moments(x.reshape(n * c, h * w), tile_bytes=tile_bytes)
    return m.reshape(n, c, 1, 1), s.reshape(n, c, 1, 1)


class StyleLossMeanStd:
    """JAX/Pallas port of the PyTorch StyleLossMeanStd module."""

    def __init__(self, target):
        n, c, h, w = target.shape
        tm, ts = _row_abs_moments(target.reshape(n * c, h * w))
        self._tm_rows, self._ts_rows = tm, ts
        self.target_mean = tm.reshape(n, c, 1, 1)
        self.target_std = ts.reshape(n, c, 1, 1)
        # Balancing factors depend only on the target -> hoisted out of forward.
        self._mean_bf = jnp.abs(jnp.minimum(1.0 / jnp.mean(tm), 1.0))
        self._std_bf = jnp.abs(jnp.minimum(1.0 / jnp.mean(ts), 1.0))
        self.loss = jnp.float32(0.0)

    def __call__(self, x):
        n, c, h, w = x.shape
        # Input streams in its native dtype; f32 cast happens inside the kernel.
        im, istd = _row_abs_moments(x.reshape(n * c, h * w))
        mse_mean = jnp.mean((im - self._tm_rows) ** 2)   # F.mse_loss over N*C elements
        mse_std = jnp.mean((istd - self._ts_rows) ** 2)
        self.loss = self._mean_bf * mse_mean + self._std_bf * mse_std
        return x                                         # pass-through, like torch forward


# ----------------------------- plain-JAX references -----------------------------

def _ref_row_abs_moments(x2d):
    x = x2d.astype(jnp.float32)
    m = jnp.mean(x, axis=1)
    v = jnp.var(x, axis=1, ddof=1)
    return jnp.abs(m), jnp.sqrt(v + EPS)


def _reference_loss(x, target):
    def moments(a):
        n, c, h, w = a.shape
        return _ref_row_abs_moments(a.reshape(n * c, h * w))

    tm, ts = moments(target)
    im, istd = moments(x)
    mbf = jnp.abs(jnp.minimum(1.0 / jnp.mean(tm), 1.0))
    sbf = jnp.abs(jnp.minimum(1.0 / jnp.mean(ts), 1.0))
    return mbf * jnp.mean((im - tm) ** 2) + sbf * jnp.mean((istd - ts) ** 2)


if __name__ == "__main__":
    key = jax.random.PRNGKey(0)
    k_t, k_x = jax.random.split(key)
    # Small NCHW shapes consistent with a feature map.
    target = jax.random.normal(k_t, (2, 4, 16, 16), dtype=jnp.float32)
    x = jax.random.normal(k_x, (2, 4, 16, 16), dtype=jnp.float32)

    module = StyleLossMeanStd(target)
    out = jax.block_until_ready(module(x))
    loss = jax.block_until_ready(module.loss)
    ref = jax.block_until_ready(_reference_loss(x, target))
    assert out.shape == x.shape and out.dtype == x.dtype
    # One-pass (sum / sum-sq) moments vs the two-pass jnp.var reference: identical
    # math up to f32 accumulation order, so compare with a slightly looser rtol.
    assert jnp.allclose(loss, ref, rtol=5e-4, atol=1e-6), (loss, ref)

    # Exercise the HW-tiled one-pass path (forced tiny tile budget, ragged 324-wide
    # spatial tail masked only on the last HW tile, NC tiled over 2 parallel row-blocks).
    x_odd = jax.random.normal(jax.random.PRNGKey(1), (4, 4, 18, 18), dtype=jnp.float32)
    x2d = x_odd.reshape(16, 18 * 18)
    m_k, s_k = _row_abs_moments(x2d, tile_bytes=4096)
    jax.block_until_ready((m_k, s_k))
    m_r, s_r = _ref_row_abs_moments(x2d)
    assert jnp.allclose(m_k, m_r, rtol=1e-4, atol=1e-6), (m_k, m_r)
    assert jnp.allclose(s_k, s_r, rtol=1e-4, atol=1e-6), (s_k, s_r)

    # bf16 input streams in native dtype (cast to f32 inside the kernel after the load).
    _ = module(x.astype(jnp.bfloat16))
    loss_bf16 = jax.block_until_ready(module.loss)
    assert bool(jnp.isfinite(loss_bf16))

    # TODO(synk): for mean-dominated activations with extremely large H*W, upgrade the
    # one-pass sum/sumsq variance to a chunk-wise Chan merge for extra precision, and
    # consider offloading the lane reductions to the idle MXU (ones-vector matmul) if
    # v7x bf16 profiles show the VALU slot saturating.
    print("KERNEL_OK")
</pallas_src>

<mosaic_0001>
module attributes {stable_mosaic.version = 11 : i64} {
  func.func @_moments_kernel_full_hw(%arg0: i32, %arg1: memref<8x256xf32, #tpu.memory_space<vmem>>, %arg2: memref<8x128xf32, #tpu.memory_space<vmem>>, %arg3: memref<8x128xf32, #tpu.memory_space<vmem>>) attributes {dimension_semantics = [#tpu.dimension_semantics<parallel>], iteration_bounds = array<i64: 1>, scalar_prefetch = 0 : i64, scratch_operands = 0 : i64, tpu.core_type = #tpu.core_type<tc>, window_params = [{transform_indices = @transform_0, window_bounds = array<i64: 8, 256>}, {transform_indices = @transform_1, window_bounds = array<i64: 8, 128>}, {transform_indices = @transform_2, window_bounds = array<i64: 8, 128>}]} {
    %c0 = arith.constant 0 : index
    %c0_0 = arith.constant 0 : index
    %0 = vector.load %arg1[%c0, %c0_0] : memref<8x256xf32, #tpu.memory_space<vmem>>, vector<8x256xf32>
    %cst = arith.constant dense<0.000000e+00> : vector<8xf32>
    %1 = vector.multi_reduction <add>, %0, %cst [1] : vector<8x256xf32> to vector<8xf32>
    %2 = vector.shape_cast %1 : vector<8xf32> to vector<8x1xf32>
    %3 = arith.mulf %0, %0 : vector<8x256xf32>
    %cst_1 = arith.constant dense<0.000000e+00> : vector<8xf32>
    %4 = vector.multi_reduction <add>, %3, %cst_1 [1] : vector<8x256xf32> to vector<8xf32>
    %5 = vector.shape_cast %4 : vector<8xf32> to vector<8x1xf32>
    %cst_2 = arith.constant 2.560000e+02 : f32
    %6 = vector.broadcast %cst_2 : f32 to vector<8x1xf32>
    %7 = arith.divf %2, %6 : vector<8x1xf32>
    %8 = arith.mulf %2, %7 : vector<8x1xf32>
    %9 = arith.subf %5, %8 : vector<8x1xf32>
    %cst_3 = arith.constant 2.550000e+02 : f32
    %10 = vector.broadcast %cst_3 : f32 to vector<8x1xf32>
    %11 = arith.divf %9, %10 : vector<8x1xf32>
    %cst_4 = arith.constant 0.000000e+00 : f32
    %12 = vector.broadcast %cst_4 : f32 to vector<8x1xf32>
    %13 = arith.maximumf %11, %12 : vector<8x1xf32>
    %cst_5 = arith.constant 9.99999974E-6 : f32
    %14 = vector.broadcast %cst_5 : f32 to vector<8x1xf32>
    %15 = arith.addf %13, %14 : vector<8x1xf32>
    %16 = math.sqrt %15 : vector<8x1xf32>
    %17 = math.absf %7 : vector<8x1xf32>
    %18 = vector.shape_cast %17 : vector<8x1xf32> to vector<8x1xf32>
    %19 = vector.broadcast %18 : vector<8x1xf32> to vector<8x128xf32>
    %c0_6 = arith.constant 0 : index
    %c0_7 = arith.constant 0 : index
    %20 = vector.load %arg2[%c0_6, %c0_7] : memref<8x128xf32, #tpu.memory_space<vmem>>, vector<8x128xf32>
    tpu.vector_store %arg2[%c0_6, %c0_7], %19 {strides = array<i32>} : memref<8x128xf32, #tpu.memory_space<vmem>>, vector<8x128xf32>,
    %21 = vector.shape_cast %16 : vector<8x1xf32> to vector<8x1xf32>
    %22 = vector.broadcast %21 : vector<8x1xf32> to vector<8x128xf32>
    %c0_8 = arith.constant 0 : index
    %c0_9 = arith.constant 0 : index
    %23 = vector.load %arg3[%c0_8, %c0_9] : memref<8x128xf32, #tpu.memory_space<vmem>>, vector<8x128xf32>
    tpu.vector_store %arg3[%c0_8, %c0_9], %22 {strides = array<i32>} : memref<8x128xf32, #tpu.memory_space<vmem>>, vector<8x128xf32>,
    return
  }
  func.func @transform_0(%arg0: i32) -> (i32, i32) {
    %c0_i32 = arith.constant 0 : i32
    %c0_i32_0 = arith.constant 0 : i32
    return %arg0, %c0_i32 : i32, i32
  }
  func.func @transform_1(%arg0: i32) -> (i32, i32) {
    %c0_i32 = arith.constant 0 : i32
    %c0_i32_0 = arith.constant 0 : i32
    return %arg0, %c0_i32 : i32, i32
  }
  func.func @transform_2(%arg0: i32) -> (i32, i32) {
    %c0_i32 = arith.constant 0 : i32
    %c0_i32_0 = arith.constant 0 : i32
    return %arg0, %c0_i32 : i32, i32
  }
}

</mosaic_0001>

<llo_original>
// kernel: tpu_custom_call.1
$region0: #{tpu_custom_call.1}
  #allocation0 [shape = 'u32[]', space=smem, size = 0x4, offset = 0x4, fixed_abs, tag = 'smem constant byte address 0x4 - core index']
  #allocation1 [shape = 'u32[144,128]{1,0:T(1,128)}', space=vmem, size = 0x12000, scoped, tag = 'internal scratch']
  %s0 = inlined_call_operand.hbm [shape: f32[8,256], index: 0, kind: input, shape index: {}]
  %s1 = inlined_call_operand.hbm [shape: f32[8,128], index: 1, kind: output, shape index: {0}]
  %s2 = inlined_call_operand.hbm [shape: f32[8,128], index: 2, kind: output, shape index: {1}]
  %3 = xla_tuple %s1, %s2
  %s4 = sld [smem:[#allocation0]]
  $region26: #{tpu_custom_call.1} parent=0
    _
  %s6 = ssub.s32 1, %s4
  %s7 = scalar_select 0, %s6, %s4
  $region1: #{tpu_custom_call.1} parent=0
    #allocation2 [shape = 'u8[8192]{0}', space=vmem, size = 0x2000, scoped, tag = 'input window, operand 0, single buffered']
    #allocation3 [shape = 's32[1]{0}', space=sflag, size = 0x4, scoped, tag = 'scoped memory for tpu_custom_call.1']
    #allocation4 [shape = 's32[1]{0}', space=sflag, size = 0x4, scoped, tag = 'scoped memory for tpu_custom_call.1']
    #allocation5 [shape = 'u8[4096]{0}', space=vmem, size = 0x1000, scoped, tag = 'output window, operand 0, single buffered']
    #allocation6 [shape = 'u8[4096]{0}', space=vmem, size = 0x1000, scoped, tag = 'output window, operand 1, single buffered']
    #allocation7 [shape = 's32[1]{0}', space=sflag, size = 0x4, scoped, tag = 'scoped memory for tpu_custom_call.1']
    %8 = vsyncpa [#allocation3], 0
    %9 = vsyncpa [#allocation4], 0
    %10 = vsyncpa [#allocation7], 0
    // Predicated region
    $region2: #{tpu_custom_call.1} parent=1 // pred_check
      _
    $region3: #{tpu_custom_call.1} parent=1 // pred_check_branch
      %12 = sbr.rel (0) target = $region5
    $region4: #{tpu_custom_call.1} parent=1 // pred_region
      %s14 = ssub.s32 256, 256
      %15 = vsyncadd [#allocation3], %s14
      %s17 = sshll.u32 [#allocation2], 4
      %s18 = int_to_ptr.vmem [resolvable:$true] %s17
      %20 = dma.hbm_to_vmem [thread:$0]  %s0, 256, %s18, [#allocation3]
    $region5: #{tpu_custom_call.1} parent=1 // pred_fallthru
      _
    // Predicated region
    $region6: #{tpu_custom_call.1} parent=1 // pred_check
      _
    $region7: #{tpu_custom_call.1} parent=1 // pred_check_branch
      %22 = sbr.rel (0) target = $region9
    $region8: #{tpu_custom_call.1} parent=1 // pred_region
      %23 = dma.done [#allocation3], 256
    $region9: #{tpu_custom_call.1} parent=1 // pred_fallthru
      _
    %v24 = vld [vmem:[#allocation2] sm:$0xff]
    %v25 = vld [vmem:[#allocation2 + $0x8] sm:$0xff]
    %v26 = vadd.f32 %v24, %v25
    %27 = vadd.xlane.f32.xlu0 %v26
    %v28 = vpop.xlane.xlu0 %27
    %v29 = vmul.f32 %v24, %v24
    %v30 = vmul.f32 %v25, %v25
    %v31 = vadd.f32 %v29, %v30
    %32 = vadd.xlane.f32.xlu0 %v31
    %v33 = vpop.xlane.xlu0 %32
    %v34 = vrcp.pop 256.0
    %v35 = vmul.f32 %v28, %v34
    %v36 = vmul.f32 %v28, %v35
    %v37 = vsub.f32 %v33, %v36
    %v38 = vrcp.pop 255.0
    %v39 = vmul.f32 %v37, %v38
    %v40 = vmax.f32 %v39, 0.0
    %v41 = vadd.f32 %v40, 1e-05
    %v42 = vrsqrt.pop %v41
    %v43 = vmul.f32 %v41, %v42
    %vm44 = vcmp.eq.f32.partialorder %v41, inf
    %v45 = vsel %vm44, %v41, %v43
    %vm46 = vcmp.eq.f32.partialorder %v41, 0.0
    %v47 = vand.u32 %v41, 2147483648
    %v48 = vsel %vm46, %v47, %v45
    %v49 = vand.u32 2147483647, %v35
    %50 = vst [vmem:[#allocation5] sm:$0xff] %v49
    %51 = vst [vmem:[#allocation6] sm:$0xff] %v48
    // Predicated region
    $region10: #{tpu_custom_call.1} parent=1 // pred_check
      _
    $region11: #{tpu_custom_call.1} parent=1 // pred_check_branch
      %53 = sbr.rel (0) target = $region13
    $region12: #{tpu_custom_call.1} parent=1 // pred_region
      %s55 = ssub.s32 128, 128
      %56 = vsyncadd [#allocation4], %s55
      %s58 = sshll.u32 [#allocation5], 4
      %s59 = int_to_ptr.vmem [resolvable:$true] %s58
      %61 = dma.vmem_to_hbm [thread:$0]  %s59, 128, %s1, [#allocation4]
    $region13: #{tpu_custom_call.1} parent=1 // pred_fallthru
      _
    // Predicated region
    $region14: #{tpu_custom_call.1} parent=1 // pred_check
      _
    $region15: #{tpu_custom_call.1} parent=1 // pred_check_branch
      %63 = sbr.rel (0) target = $region17
    $region16: #{tpu_custom_call.1} parent=1 // pred_region
      %s65 = ssub.s32 128, 128
      %66 = vsyncadd [#allocation7], %s65
      %s68 = sshll.u32 [#allocation6], 4
      %s69 = int_to_ptr.vmem [resolvable:$true] %s68
      %71 = dma.vmem_to_hbm [thread:$0]  %s69, 128, %s2, [#allocation7]
    $region17: #{tpu_custom_call.1} parent=1 // pred_fallthru
      _
    // Predicated region
    $region18: #{tpu_custom_call.1} parent=1 // pred_check
      _
    $region19: #{tpu_custom_call.1} parent=1 // pred_check_branch
      %73 = sbr.rel (0) target = $region21
    $region20: #{tpu_custom_call.1} parent=1 // pred_region
      %74 = dma.done [#allocation4], 128
    $region21: #{tpu_custom_call.1} parent=1 // pred_fallthru
      _
    // Predicated region
    $region22: #{tpu_custom_call.1} parent=1 // pred_check
      _
    $region23: #{tpu_custom_call.1} parent=1 // pred_check_branch
      %76 = sbr.rel (0) target = $region25
    $region24: #{tpu_custom_call.1} parent=1 // pred_region
      %77 = dma.done [#allocation7], 128
    $region25: #{tpu_custom_call.1} parent=1 // pred_fallthru
      _
    %78 = vsyncpa [#allocation3], 1
    %79 = vsyncpa [#allocation4], 1
    %80 = vsyncpa [#allocation7], 1

</llo_original>
